<compile_context>
chip_gen: v5e
topology: v5e:2x2
jax: 0.10.0
libtpu: 0.0.40
codegen_flags: <defaults>
</compile_context>

<pallas_src>
import functools
import math

import jax
import jax.numpy as jnp
from jax.experimental import pallas as pl
from jax.experimental.pallas import tpu as pltpu


# ---------------------------------------------------------------------------
# Kernels
# ---------------------------------------------------------------------------

def _xypad_full_channel_kernel(x_ref, o_ref, *, P, D, H, W):
    """One whole channel per grid step, (H, W) flattened into the lane axis.

    x_ref: (D, H*W);  o_ref: (D + 2P, (H + 2P) * W).
    """
    dt = o_ref.dtype
    HW_out = (H + 2 * P) * W
    # Front / back depth-padding planes (full lane-dense rows).
    o_ref[pl.ds(0, P), :] = jnp.zeros((P, HW_out), dt)
    o_ref[pl.ds(P + D, P), :] = jnp.zeros((P, HW_out), dt)
    # Top / bottom H-padding: contiguous P*W-column bands of the interior planes.
    o_ref[pl.ds(P, D), pl.ds(0, P * W)] = jnp.zeros((D, P * W), dt)
    o_ref[pl.ds(P, D), pl.ds((P + H) * W, P * W)] = jnp.zeros((D, P * W), dt)
    # Interior copy: the only real load -> store.
    o_ref[pl.ds(P, D), pl.ds(P * W, H * W)] = x_ref[...]


def _xypad_flat_depth_kernel(x_ref, o_ref, *, P, H, W, n_front, n_interior):
    """TD output-depth planes per step, (H, W) flattened into the lane axis.

    x_ref: (TD, H*W)        input depth block (ignored for pure-pad blocks)
    o_ref: (TD, (H+2P)*W)   output depth block
    TD | gcd(P, D) and TD is sublane-aligned, so every block is either entirely
    depth-padding or entirely interior.
    """
    d = pl.program_id(1)
    TD = o_ref.shape[0]
    dt = o_ref.dtype
    is_interior = jnp.logical_and(d >= n_front, d < n_front + n_interior)

    @pl.when(is_interior)
    def _():
        o_ref[:, pl.ds(0, P * W)] = jnp.zeros((TD, P * W), dt)
        o_ref[:, pl.ds(P * W, H * W)] = x_ref[...]
        o_ref[:, pl.ds((P + H) * W, P * W)] = jnp.zeros((TD, P * W), dt)

    @pl.when(jnp.logical_not(is_interior))
    def _():
        o_ref[...] = jnp.zeros(o_ref.shape, dt)


def _xypad_depth_tiled_kernel_4d(x_ref, o_ref, *, P, H, n_front, n_interior):
    """Last-resort fallback: TD output-depth planes per step, W stays the lane dim.

    Only used when a whole channel does not fit VMEM *and* gcd(P, D) has no
    sublane-aligned divisor (so the flattened depth tiling would violate the
    (8, 128) block-shape rule).
    """
    d = pl.program_id(1)
    TD, H_out, W = o_ref.shape
    dt = o_ref.dtype
    is_interior = jnp.logical_and(d >= n_front, d < n_front + n_interior)

    @pl.when(is_interior)
    def _():
        o_ref[:, pl.ds(0, P), :] = jnp.zeros((TD, P, W), dt)
        o_ref[:, pl.ds(P, H), :] = x_ref[...]
        o_ref[:, pl.ds(P + H, P), :] = jnp.zeros((TD, P, W), dt)

    @pl.when(jnp.logical_not(is_interior))
    def _():
        o_ref[...] = jnp.zeros(o_ref.shape, dt)


# ---------------------------------------------------------------------------
# Budget helpers (tiled-footprint aware, generation aware)
# ---------------------------------------------------------------------------

def _round_up(x, m):
    return -(-x // m) * m


def _sublane_pack(dtype):
    # 8 rows/vreg for 32-bit, 16 for bf16, 32 for int8 (packed sublanes).
    return 8 * max(1, 4 // jnp.dtype(dtype).itemsize)


def _block_vmem_bytes(block_shape, dtype):
    """VMEM bytes of one buffered copy of a block, after (sublane, lane) tiling."""
    itemsize = jnp.dtype(dtype).itemsize
    shape = [int(s) for s in block_shape]
    shape[-1] = _round_up(shape[-1], 128)
    if len(shape) >= 2:
        shape[-2] = _round_up(shape[-2], _sublane_pack(dtype))
    n = 1
    for s in shape:
        n *= s
    return n * itemsize


def _vmem_capacity_bytes():
    try:
        info = pltpu.get_tpu_info()
        cap = int(getattr(info, "vmem_capacity_bytes", 0) or 0)
        if cap > 0:
            return cap
    except Exception:
        pass
    return 64 * 1024 * 1024   # conservative default: v7x per-core VMEM


# ---------------------------------------------------------------------------
# Wrapper
# ---------------------------------------------------------------------------

def xy_pad_3d(x, padding, mode="constant", *, block_budget_bytes=None):
    """Pallas equivalent of XYPad3D(padding, mode).forward(x).

    x: (1, C, D, H, W)  ->  (1, C, D + 2*padding, H + 2*padding, W)
    """
    if x.shape[0] != 1:
        raise NotImplementedError(
            "TODO: 5D padding with batch size > 1 not implemented")
    if mode != "constant":
        # TODO(synk): only 'constant' (zero) padding is implemented in the kernel.
        raise NotImplementedError("only mode='constant' is implemented")

    P = int(padding)
    if P == 0:
        return x
    if P < 0:
        raise NotImplementedError("negative (cropping) padding not implemented")

    xv = x[0]                               # (C, D, H, W)
    C, D, H, W = xv.shape
    D_out, H_out = D + 2 * P, H + 2 * P
    HW, HW_out = H * W, H_out * W
    dtype = x.dtype
    spack = _sublane_pack(dtype)

    # --- generation-aware VMEM budgets -------------------------------------
    phys = _vmem_capacity_bytes()
    if phys >= (128 << 20):                 # v5e / v6e: 128 MiB VMEM, 1 TC
        gen_budget, limit_cap, two_tc = (88 << 20), (100 << 20), False
    else:                                   # v7x (64 MiB per-core, 2 TC) / unknown
        gen_budget, limit_cap, two_tc = (36 << 20), (phys - (16 << 20)), True
    block_budget = gen_budget if block_budget_bytes is None else int(block_budget_bytes)
    # Soft per-step target when two TensorCores share the grid: blocks past a few
    # MiB are already at the HBM roofline, smaller steps balance the cores better.
    preferred_db = 16 << 20

    # --- per-step double-buffered footprints (from the TILED block shapes) --
    chan_db = 2 * (_block_vmem_bytes((D, HW), dtype) +
                   _block_vmem_bytes((D_out, HW_out), dtype))

    def _td_db_flat(td):
        return 2 * (_block_vmem_bytes((td, HW), dtype) +
                    _block_vmem_bytes((td, HW_out), dtype))

    def _td_db_4d(td):
        return 2 * (_block_vmem_bytes((td, H, W), dtype) +
                    _block_vmem_bytes((td, H_out, W), dtype))

    def _pick_td(cands, db_fn):
        fit_hard = [t for t in cands if db_fn(t) <= block_budget]
        fit_soft = [t for t in fit_hard if db_fn(t) <= preferred_db]
        if two_tc and fit_soft:
            return max(fit_soft)
        return max(fit_hard) if fit_hard else 0

    # Flattened depth-tiling candidate: TD | gcd(P, D) keeps every block purely
    # pad or purely interior; TD a multiple of the sublane pack keeps the
    # (TD, H*W) block shape tile-aligned.
    # TODO(synk): relax the TD | gcd(P, D) alignment (mixed pad/interior blocks or
    # a manual HBM->HBM DMA interior copy, pl.ANY + make_async_copy) so arbitrary
    # P still gets large flattened tiles.
    g = math.gcd(P, D)
    cands_flat = [t for t in range(spack, g + 1, spack) if g % t == 0]
    td_flat = _pick_td(cands_flat, _td_db_flat)

    # --- path selection ------------------------------------------------------
    use_primary = chan_db <= block_budget
    if use_primary and two_tc and td_flat:
        # v7x: guarantee >= 2 parallel grid steps (2 TensorCores) and keep
        # per-step blocks modest instead of "as big as fits".
        if C < 2 or chan_db > preferred_db:
            use_primary = False

    if use_primary:
        kernel = functools.partial(_xypad_full_channel_kernel, P=P, D=D, H=H, W=W)
        grid = (C,)
        in_arr = xv.reshape(C, D, HW)               # free contiguous view
        out_shape = jax.ShapeDtypeStruct((C, D_out, HW_out), dtype)
        in_specs = [pl.BlockSpec((None, D, HW), lambda c: (c, 0, 0))]
        out_specs = pl.BlockSpec((None, D_out, HW_out), lambda c: (c, 0, 0))
        semantics = ("parallel",)
        step_db = chan_db
    elif td_flat:
        TD = td_flat
        n_front, n_interior = P // TD, D // TD
        kernel = functools.partial(_xypad_flat_depth_kernel, P=P, H=H, W=W,
                                   n_front=n_front, n_interior=n_interior)
        grid = (C, D_out // TD)
        in_arr = xv.reshape(C, D, HW)
        out_shape = jax.ShapeDtypeStruct((C, D_out, HW_out), dtype)
        in_specs = [pl.BlockSpec(
            (None, TD, HW),
            # Clamp into range for pure-pad blocks (their input is ignored).
            lambda c, d: (c, jnp.clip(d - n_front, 0, n_interior - 1), 0))]
        out_specs = pl.BlockSpec((None, TD, HW_out), lambda c, d: (c, d, 0))
        semantics = ("parallel", "parallel")
        step_db = _td_db_flat(TD)
        # TODO(synk): if these blocks ever get small enough to expose DMA latency,
        # add pipeline_mode=pl.Buffered(3) on the in/out BlockSpecs.
    else:
        # Last-resort: W stays the lane dim (narrow stores) but the (8,128)
        # block-shape rule holds because the last two block dims are full dims.
        cands_4d = [t for t in range(1, g + 1) if g % t == 0]
        TD = _pick_td(cands_4d, _td_db_4d) or 1
        n_front, n_interior = P // TD, D // TD
        kernel = functools.partial(_xypad_depth_tiled_kernel_4d, P=P, H=H,
                                   n_front=n_front, n_interior=n_interior)
        grid = (C, D_out // TD)
        in_arr = xv
        out_shape = jax.ShapeDtypeStruct((C, D_out, H_out, W), dtype)
        in_specs = [pl.BlockSpec(
            (None, TD, H, W),
            lambda c, d: (c, jnp.clip(d - n_front, 0, n_interior - 1), 0, 0))]
        out_specs = pl.BlockSpec((None, TD, H_out, W), lambda c, d: (c, d, 0, 0))
        semantics = ("parallel", "parallel")
        step_db = _td_db_4d(TD)

    # TODO(synk): for bf16/int8 inputs, bitcast W-pairs/quads to uint32 in the
    # wrapper (pltpu.bitcast) so all stores stay aligned 32-bit moves.

    # vmem_limit derived from the same tiled footprint as the budget, so the cap
    # can never clamp below what the selected blocks actually need.
    vmem_limit = min(max(step_db + (4 << 20), 32 << 20), limit_cap)
    vmem_limit = int(max(vmem_limit, min(step_db + (2 << 20), phys - (8 << 20))))

    out = pl.pallas_call(
        kernel,
        out_shape=out_shape,
        grid=grid,
        in_specs=in_specs,
        out_specs=out_specs,
        compiler_params=pltpu.CompilerParams(
            dimension_semantics=semantics,
            vmem_limit_bytes=vmem_limit),
    )(in_arr)

    # Free contiguous view back to (C, D_out, H_out, W), then re-add batch dim.
    return out.reshape(C, D_out, H_out, W)[None]


# ---------------------------------------------------------------------------
# Self-test
# ---------------------------------------------------------------------------

if __name__ == "__main__":
    key = jax.random.PRNGKey(0)

    # Module requires batch == 1.
    B, C, D, H, W = 1, 4, 8, 16, 16
    P = 2
    x = jax.random.normal(key, (B, C, D, H, W), dtype=jnp.float32)
    ref = jnp.pad(x[0], ((0, 0), (P, P), (P, P), (0, 0)), mode="constant")[None]

    # 1) Primary path: whole channel per grid step (flattened H*W lane axis).
    y = jax.block_until_ready(xy_pad_3d(x, P, mode="constant"))
    assert y.shape == (B, C, D + 2 * P, H + 2 * P, W), y.shape
    assert jnp.array_equal(y, ref), "full-channel path mismatch vs. jnp.pad"

    # 2) Flattened depth-tiled path (forced with a small budget; needs a
    #    sublane-aligned divisor of gcd(P, D) -> use P=8, D=16).
    x2 = jax.random.normal(jax.random.PRNGKey(0), (1, 2, 16, 16, 16), jnp.float32)
    P2 = 8
    ref2 = jnp.pad(x2[0], ((0, 0), (P2, P2), (P2, P2), (0, 0)), mode="constant")[None]
    y2 = jax.block_until_ready(
        xy_pad_3d(x2, P2, mode="constant", block_budget_bytes=96 * 1024))
    assert jnp.array_equal(y2, ref2), "flattened depth-tiled path mismatch vs. jnp.pad"

    # 3) Last-resort unflattened depth-tiled path (gcd(P, D)=2 has no sublane-
    #    aligned divisor; forced with a small budget).
    y3 = jax.block_until_ready(
        xy_pad_3d(x, P, mode="constant", block_budget_bytes=48 * 1024))
    assert jnp.array_equal(y3, ref), "4-D depth-tiled path mismatch vs. jnp.pad"

    print("KERNEL_OK")
</pallas_src>

<mosaic_0001>
module attributes {stable_mosaic.version = 11 : i64} {
  func.func @_xypad_full_channel_kernel(%arg0: i32, %arg1: memref<1x8x256xf32, #tpu.memory_space<vmem>>, %arg2: memref<1x12x320xf32, #tpu.memory_space<vmem>>) attributes {dimension_semantics = [#tpu.dimension_semantics<parallel>], iteration_bounds = array<i64: 4>, scalar_prefetch = 0 : i64, scratch_operands = 0 : i64, tpu.core_type = #tpu.core_type<tc>, window_params = [{transform_indices = @transform_0, window_bounds = array<i64: 1, 8, 256>}, {transform_indices = @transform_1, window_bounds = array<i64: 1, 12, 320>}]} {
    %cst = arith.constant 0.000000e+00 : f32
    %0 = vector.broadcast %cst : f32 to vector<2x320xf32>
    %c0 = arith.constant 0 : index
    %c0_0 = arith.constant 0 : index
    %c0_1 = arith.constant 0 : index
    %1 = vector.load %arg2[%c0, %c0_0, %c0_1] : memref<1x12x320xf32, #tpu.memory_space<vmem>>, vector<1x2x320xf32>
    %2 = vector.shape_cast %1 : vector<1x2x320xf32> to vector<2x320xf32>
    %3 = vector.shape_cast %0 : vector<2x320xf32> to vector<1x2x320xf32>
    tpu.vector_store %arg2[%c0, %c0_0, %c0_1], %3 {strides = array<i32>} : memref<1x12x320xf32, #tpu.memory_space<vmem>>, vector<1x2x320xf32>,
    %cst_2 = arith.constant 0.000000e+00 : f32
    %4 = vector.broadcast %cst_2 : f32 to vector<2x320xf32>
    %c0_3 = arith.constant 0 : index
    %c10 = arith.constant 10 : index
    %c0_4 = arith.constant 0 : index
    %5 = vector.load %arg2[%c0_3, %c10, %c0_4] : memref<1x12x320xf32, #tpu.memory_space<vmem>>, vector<1x2x320xf32>
    %6 = vector.shape_cast %5 : vector<1x2x320xf32> to vector<2x320xf32>
    %7 = vector.shape_cast %4 : vector<2x320xf32> to vector<1x2x320xf32>
    tpu.vector_store %arg2[%c0_3, %c10, %c0_4], %7 {strides = array<i32>} : memref<1x12x320xf32, #tpu.memory_space<vmem>>, vector<1x2x320xf32>,
    %cst_5 = arith.constant 0.000000e+00 : f32
    %8 = vector.broadcast %cst_5 : f32 to vector<8x32xf32>
    %c0_6 = arith.constant 0 : index
    %c2 = arith.constant 2 : index
    %c0_7 = arith.constant 0 : index
    %9 = vector.load %arg2[%c0_6, %c2, %c0_7] : memref<1x12x320xf32, #tpu.memory_space<vmem>>, vector<1x8x32xf32>
    %10 = vector.shape_cast %9 : vector<1x8x32xf32> to vector<8x32xf32>
    %11 = vector.shape_cast %8 : vector<8x32xf32> to vector<1x8x32xf32>
    tpu.vector_store %arg2[%c0_6, %c2, %c0_7], %11 {strides = array<i32>} : memref<1x12x320xf32, #tpu.memory_space<vmem>>, vector<1x8x32xf32>,
    %cst_8 = arith.constant 0.000000e+00 : f32
    %12 = vector.broadcast %cst_8 : f32 to vector<8x32xf32>
    %c0_9 = arith.constant 0 : index
    %c2_10 = arith.constant 2 : index
    %c288 = arith.constant 288 : index
    %13 = vector.load %arg2[%c0_9, %c2_10, %c288] : memref<1x12x320xf32, #tpu.memory_space<vmem>>, vector<1x8x32xf32>
    %14 = vector.shape_cast %13 : vector<1x8x32xf32> to vector<8x32xf32>
    %15 = vector.shape_cast %12 : vector<8x32xf32> to vector<1x8x32xf32>
    tpu.vector_store %arg2[%c0_9, %c2_10, %c288], %15 {strides = array<i32>} : memref<1x12x320xf32, #tpu.memory_space<vmem>>, vector<1x8x32xf32>,
    %c0_11 = arith.constant 0 : index
    %c0_12 = arith.constant 0 : index
    %c0_13 = arith.constant 0 : index
    %16 = vector.load %arg1[%c0_11, %c0_12, %c0_13] : memref<1x8x256xf32, #tpu.memory_space<vmem>>, vector<1x8x256xf32>
    %17 = vector.shape_cast %16 : vector<1x8x256xf32> to vector<8x256xf32>
    %c0_14 = arith.constant 0 : index
    %c2_15 = arith.constant 2 : index
    %c32 = arith.constant 32 : index
    %18 = vector.load %arg2[%c0_14, %c2_15, %c32] : memref<1x12x320xf32, #tpu.memory_space<vmem>>, vector<1x8x256xf32>
    %19 = vector.shape_cast %18 : vector<1x8x256xf32> to vector<8x256xf32>
    %20 = vector.shape_cast %17 : vector<8x256xf32> to vector<1x8x256xf32>
    tpu.vector_store %arg2[%c0_14, %c2_15, %c32], %20 {strides = array<i32>} : memref<1x12x320xf32, #tpu.memory_space<vmem>>, vector<1x8x256xf32>,
    return
  }
  func.func @transform_0(%arg0: i32) -> (i32, i32, i32) {
    %c0_i32 = arith.constant 0 : i32
    %c0_i32_0 = arith.constant 0 : i32
    %c0_i32_1 = arith.constant 0 : i32
    return %arg0, %c0_i32, %c0_i32_0 : i32, i32, i32
  }
  func.func @transform_1(%arg0: i32) -> (i32, i32, i32) {
    %c0_i32 = arith.constant 0 : i32
    %c0_i32_0 = arith.constant 0 : i32
    %c0_i32_1 = arith.constant 0 : i32
    return %arg0, %c0_i32, %c0_i32_0 : i32, i32, i32
  }
}

</mosaic_0001>

<llo_original>
// kernel: tpu_custom_call.1
$region0: #{tpu_custom_call.1}
  #allocation0 [shape = 'u32[]', space=smem, size = 0x4, offset = 0x4, fixed_abs, tag = 'smem constant byte address 0x4 - core index']
  #allocation1 [shape = 'u32[72,128]{1,0:T(1,128)}', space=vmem, size = 0x9000, scoped, tag = 'internal scratch']
  %s0 = inlined_call_operand.hbm [shape: f32[4,8,256], index: 0, kind: input, shape index: {}]
  %s1 = inlined_call_operand.vmem [shape: f32[4,12,320], index: 1, kind: output, shape index: {}]
  %s2 = sld [smem:[#allocation0]]
  $region41: #{tpu_custom_call.1} parent=0
    _
  %s4 = ssub.s32 1, %s2
  %s5 = scalar_select 0, %s4, %s2
  $region1: #{tpu_custom_call.1} parent=0
    #allocation2 [shape = 'u8[16384]{0}', space=vmem, size = 0x4000, scoped, tag = 'input window, operand 0']
    #allocation3 [shape = 's32[2]{0}', space=sflag, size = 0x8, scoped, tag = 'scoped memory for tpu_custom_call.1']
    %6 = vsyncpa [#allocation3], 0
    %s7 = scalar_lea.sflag [#allocation3], 1
    %8 = vsyncpa %s7, 0
    loop: start=0, step=1, limit=6
    $region2: #{tpu_custom_call.1} parent=1 // loop_pre_header
      _
    $region3: #{tpu_custom_call.1} parent=1 // loop_header
      %s10 = sphi 0, %s14
      %p11 = scmp.ge.s32.totalorder %s10, 6
      %s20 = sphi 0, %s22
      %s23 = sphi 0, %s20
      %s24 = sphi 0, %s23
      %s40 = sphi 0, %s24
      %s46 = sphi 0, %s48
      %s49 = sphi 0, %s46
      %s50 = sphi 0, %s49
      %s66 = sphi 0, %s50
    $region4: #{tpu_custom_call.1} parent=1 // loop_header_branch
      %13 = sbr.rel (%p11) target = $region8
    $region5: #{tpu_custom_call.1} parent=1 // loop_body
      %s15 = ssub.s32 %s10, 1
      %s16 = ssub.s32 %s10, 2
      %s17 = sadd.s32 %s10, 1
      %s18 = ssub.s32 %s10, %s17
      %p19 = scmp.eq.s32.totalorder %s18, 0
      %s21 = sadd.s32 %s20, 1
      %s22 = scalar_select %p19, %s20, %s21
      %p25 = pneg %p19
      %p26 = scmp.eq.s32.totalorder %s10, 3
      %p27 = por %p25, %p26
      %p28 = scmp.ne.s32.totalorder %s20, %s23
      %p29 = scmp.eq.s32.totalorder %s10, 0
      %p30 = por %p28, %p29
      %p31 = scmp.ne.s32.totalorder %s20, %s23
      %p32 = scmp.eq.s32.totalorder %s15, 3
      %p33 = por %p31, %p32
      %p34 = scmp.ne.s32.totalorder %s23, %s24
      %p35 = scmp.eq.s32.totalorder %s15, 0
      %p36 = por %p34, %p35
      %p37 = scmp.ne.s32.totalorder %s23, %s24
      %p38 = scmp.eq.s32.totalorder %s16, 3
      %p39 = por %p37, %p38
      %p41 = scmp.ne.s32.totalorder %s24, %s40
      %p42 = scmp.eq.s32.totalorder %s16, 0
      %p43 = por %p41, %p42
      %s44 = ssub.s32 %s10, %s17
      %p45 = scmp.eq.s32.totalorder %s44, 0
      %s47 = sadd.s32 %s46, 1
      %s48 = scalar_select %p45, %s46, %s47
      %p51 = pneg %p45
      %p52 = scmp.eq.s32.totalorder %s10, 3
      %p53 = por %p51, %p52
      %p54 = scmp.ne.s32.totalorder %s46, %s49
      %p55 = scmp.eq.s32.totalorder %s10, 0
      %p56 = por %p54, %p55
      %p57 = scmp.ne.s32.totalorder %s46, %s49
      %p58 = scmp.eq.s32.totalorder %s15, 3
      %p59 = por %p57, %p58
      %p60 = scmp.ne.s32.totalorder %s49, %s50
      %p61 = scmp.eq.s32.totalorder %s15, 0
      %p62 = por %p60, %p61
      %p63 = scmp.ne.s32.totalorder %s49, %s50
      %p64 = scmp.eq.s32.totalorder %s16, 3
      %p65 = por %p63, %p64
      %p67 = scmp.ne.s32.totalorder %s50, %s66
      %p68 = scmp.eq.s32.totalorder %s16, 0
      %p69 = por %p67, %p68
      %p70 = scmp.le.s32.totalorder 1, %s10
      %p71 = scmp.lt.s32.totalorder %s10, 5
      %p72 = pnand %p70, %p71
      %p73 = pneg %p72
      // Predicated region
      $region9: #{tpu_custom_call.1} parent=5 // pred_check
        _
      $region10: #{tpu_custom_call.1} parent=5 // pred_check_branch
        %75 = sbr.rel (%p72) target = $region12
      $region11: #{tpu_custom_call.1} parent=5 // pred_region
        %s76 = ssub.s32 %s10, 1
      $region12: #{tpu_custom_call.1} parent=5 // pred_fallthru
        _
      %p77 = scmp.lt.s32.totalorder %s10, 4
      // Predicated region
      $region13: #{tpu_custom_call.1} parent=5 // pred_check
        %p78 = pneg %p77
      $region14: #{tpu_custom_call.1} parent=5 // pred_check_branch
        %80 = sbr.rel (%p78) target = $region16
      $region15: #{tpu_custom_call.1} parent=5 // pred_region
        // Predicated region
        $region17: #{tpu_custom_call.1} parent=15 // pred_check
          %p81 = pneg %p30
        $region18: #{tpu_custom_call.1} parent=15 // pred_check_branch
          %83 = sbr.rel (%p81) target = $region20
        $region19: #{tpu_custom_call.1} parent=15 // pred_region
          %s84 = sand.u32 %s20, 1
          %s85 = scalar_lea.sflag [#allocation3], %s84
          %s86 = sand.u32 %s20, 1
          %s87 = smul.addr %s86, 16
          %s88 = scalar_lea.vmem [#allocation2], %s87
          %90 = vsyncadd %s85, 0
          %s91 = smul.addr %s10, 2
          %s92 = smul.addr %s91, 8
          %s93 = scalar_lea.hbm %s0, %s92
          %s95 = sshll.u32 %s93, 4
          %s96 = int_to_ptr.hbm [resolvable:$true] %s95
          %s97 = sshll.u32 %s88, 4
          %s98 = int_to_ptr.vmem [resolvable:$true] %s97
          %100 = dma.hbm_to_vmem [thread:$0]  %s96, 256, %s98, %s85
        $region20: #{tpu_custom_call.1} parent=15 // pred_fallthru
          _
      $region16: #{tpu_custom_call.1} parent=5 // pred_fallthru
        _
      %p101 = scmp.le.s32.totalorder 1, %s10
      %p102 = scmp.lt.s32.totalorder %s10, 5
      %p103 = pnand %p101, %p102
      %p104 = pneg %p103
      // Predicated region
      $region21: #{tpu_custom_call.1} parent=5 // pred_check
        _
      $region22: #{tpu_custom_call.1} parent=5 // pred_check_branch
        %106 = sbr.rel (%p103) target = $region24
      $region23: #{tpu_custom_call.1} parent=5 // pred_region
        %s107 = ssub.s32 %s10, 1
        %s108 = sand.u32 %s23, 1
        %s109 = scalar_lea.sflag [#allocation3], %s108
        %s110 = sand.u32 %s23, 1
        %s111 = smul.addr %s110, 16
        %s112 = scalar_lea.vmem [#allocation2], %s111
        // Predicated region
        $region25: #{tpu_custom_call.1} parent=23 // pred_check
          %p113 = pneg %p36
        $region26: #{tpu_custom_call.1} parent=23 // pred_check_branch
          %115 = sbr.rel (%p113) target = $region28
        $region27: #{tpu_custom_call.1} parent=23 // pred_region
          %117 = dma.done %s109, 256
        $region28: #{tpu_custom_call.1} parent=23 // pred_fallthru
          _
        %s118 = sand.u32 %s23, 1
        %s119 = scalar_lea.sflag [#allocation3], %s118
        %s120 = sand.u32 %s23, 1
        %s121 = smul.addr %s120, 16
        %s122 = scalar_lea.vmem [#allocation2], %s121
        %p123 = pneg %p36
        %p124 = pneg %p33
        %p125 = pneg %p62
        %p126 = pneg %p59
        %p127 = scmp.lt.s32.totalorder %s15, 3
        %s128 = scalar_select %p127, %s15, 3
        %s129 = smul.addr %s128, 6
        %s130 = smul.addr %s129, 8
        %s131 = scalar_lea.vmem %s1, %s130
        %p132 = scmp.lt.s32.totalorder %s15, 3
        %s133 = scalar_select %p132, %s15, 3
        %s134 = smul.addr %s133, 6
        %s135 = smul.addr %s134, 8
        %s136 = scalar_lea.vmem %s1, %s135
        %137 = vst [vmem:[%s136] sm:$0x3] 0.0
        %138 = vst [vmem:[%s136 + $0x8] sm:$0x3] 0.0
        %vm139 = vcmask 517120
        %140 = vst.msk [vmem:[%s136 + $0x10] sm:$0x3] %vm139, 0.0
        %141 = vst [vmem:[%s136 + $0x18] sm:$0xc] 0.0
        %142 = vst [vmem:[%s136 + $0x20] sm:$0xc] 0.0
        %vm143 = vcmask 519170
        %144 = vst.msk [vmem:[%s136 + $0x28] sm:$0xc] %vm143, 0.0
        %vm145 = vcmask 261122
        %146 = vst.msk [vmem:[%s136] sm:$0xfc] %vm145, 0.0
        %vm147 = vcmask 254976
        %148 = vst.msk [vmem:[%s136 + $0x18] sm:$0x3] %vm147, 0.0
        %vm149 = vcmask 523522
        %150 = vst.msk [vmem:[%s136 + $0x10] sm:$0xfc] %vm149, 0.0
        %vm151 = vcmask 517376
        %152 = vst.msk [vmem:[%s136 + $0x28] sm:$0x3] %vm151, 0.0
        %v153 = vld [vmem:[%s112] sm:$0xff]
        %v154 = vld [vmem:[%s112 + $0x8] sm:$0xff]
        %v157 = vrot.slane %v153, 6
        %v158 = vrot.slane %v154, 6
        %159 = vrot.lane.b32.xlu0 %v157, 32
        %v160 = vpop.permute.xlu0 %159
        %161 = vrot.lane.b32.xlu0 %v158, 32
        %v162 = vpop.permute.xlu0 %161
        %vm163 = vcmask 261120
        %v164 = vsel %vm163, %v160, %v162
        %vm168 = vcmask 1047810
        %169 = vst.msk [vmem:[%s136] sm:$0xfc] %vm168, %v160
        %170 = vst [vmem:[%s136 + $0x8] sm:$0xfc] %v164
        %171 = vst.msk [vmem:[%s136 + $0x10] sm:$0xfc] %vm145, %v162
        %vm172 = vcmask 1041664
        %173 = vst.msk [vmem:[%s136 + $0x18] sm:$0x3] %vm172, %v160
        %174 = vst [vmem:[%s136 + $0x20] sm:$0x3] %v164
        %175 = vst.msk [vmem:[%s136 + $0x28] sm:$0x3] %vm147, %v162
        %p176 = scmp.lt.s32.totalorder %s15, 3
        %s177 = scalar_select %p176, %s15, 3
        %s178 = smul.addr %s177, 6
        %s179 = smul.addr %s178, 8
        %s180 = scalar_lea.vmem %s1, %s179
        // Predicated region
        $region29: #{tpu_custom_call.1} parent=23 // pred_check
          %p181 = pneg %p59
        $region30: #{tpu_custom_call.1} parent=23 // pred_check_branch
          %183 = sbr.rel (%p181) target = $region32
        $region31: #{tpu_custom_call.1} parent=23 // pred_region
          _
        $region32: #{tpu_custom_call.1} parent=23 // pred_fallthru
          _
      $region24: #{tpu_custom_call.1} parent=5 // pred_fallthru
        _
      %p184 = scmp.le.s32.totalorder 2, %s10
      // Predicated region
      $region33: #{tpu_custom_call.1} parent=5 // pred_check
        %p185 = pneg %p184
      $region34: #{tpu_custom_call.1} parent=5 // pred_check_branch
        %187 = sbr.rel (%p185) target = $region36
      $region35: #{tpu_custom_call.1} parent=5 // pred_region
        %s188 = ssub.s32 %s10, 2
        // Predicated region
        $region37: #{tpu_custom_call.1} parent=35 // pred_check
          %p189 = pneg %p65
        $region38: #{tpu_custom_call.1} parent=35 // pred_check_branch
          %191 = sbr.rel (%p189) target = $region40
        $region39: #{tpu_custom_call.1} parent=35 // pred_region
          %p192 = scmp.lt.s32.totalorder %s16, 3
          %s193 = scalar_select %p192, %s16, 3
          %s194 = smul.addr %s193, 6
          %s195 = smul.addr %s194, 8
          %s196 = scalar_lea.vmem %s1, %s195
        $region40: #{tpu_custom_call.1} parent=35 // pred_fallthru
          _
      $region36: #{tpu_custom_call.1} parent=5 // pred_fallthru
        _
    $region6: #{tpu_custom_call.1} parent=1 // loop_footer
      %s14 = sadd.s32 1, %s10
    $region7: #{tpu_custom_call.1} parent=1 // loop_footer_branch
      %9 = sbr.rel target = $region3
    $region8: #{tpu_custom_call.1} parent=1 // loop_exit
      _
    %197 = vsyncpa [#allocation3], 1
    %s198 = scalar_lea.sflag [#allocation3], 1
    %199 = vsyncpa %s198, 1

</llo_original>
